<compile_context>
chip_gen: v7x
topology: tpu7x:2x2x1
jax: 0.10.0
libtpu: 0.0.40
codegen_flags: <defaults>
</compile_context>

<pallas_src>
import functools

import jax
import jax.numpy as jnp
from jax import lax
from jax.experimental import pallas as pl
from jax.experimental.pallas import tpu as pltpu


def _round_up(x, m):
    return (x + m - 1) // m * m


def _degree_norm_kernel(src_ref, dst_ref, w_ref, srcn_ref, dstn_ref, *, eps):
    """Pass 1: accumulate weighted out/in degrees over edge tiles, then
    finalize them in place to rsqrt(deg + eps) norms on the last tile."""
    i = pl.program_id(0)

    @pl.when(i == 0)
    def _init():
        srcn_ref[...] = jnp.zeros_like(srcn_ref)
        dstn_ref[...] = jnp.zeros_like(dstn_ref)

    n_pad = srcn_ref.shape[0]

    w = w_ref[...] + 1e-9                     # (1, TILE_E)
    src = src_ref[...]                        # (1, TILE_E) int32
    dst = dst_ref[...]                        # (1, TILE_E) int32

    # (N_pad, 1) iota; the compare broadcasts it against the (1, TILE_E) edge
    # indices (no full (N, E) iota materialized).  Padded edges carry index -1
    # and therefore never match any node.
    node_ids = lax.broadcasted_iota(jnp.int32, (n_pad, 1), 0)

    # Fused mask * weight (no f32 one-hot), reduced over the edge (lane) axis.
    srcn_ref[...] += jnp.sum(
        jnp.where(node_ids == src, w, 0.0), axis=1, keepdims=True)
    dstn_ref[...] += jnp.sum(
        jnp.where(node_ids == dst, w, 0.0), axis=1, keepdims=True)

    @pl.when(i == pl.num_programs(0) - 1)
    def _finalize():
        out_deg = srcn_ref[...] + eps
        in_deg = dstn_ref[...] + eps
        # Isolated / padded nodes with eps == 0 have degree 0 -> rsqrt = inf.
        # Clamp to 0: their norm is never used by a real edge, matching the
        # index-gather semantics of the reference (and avoiding NaN).
        srcn_ref[...] = jnp.where(out_deg > 0.0, lax.rsqrt(out_deg), 0.0)
        dstn_ref[...] = jnp.where(in_deg > 0.0, lax.rsqrt(in_deg), 0.0)


def _normalize_edges_kernel(srcn_ref, dstn_ref, src_ref, dst_ref, w_ref, out_ref):
    """Pass 2 (parallel over edge tiles):
       out[e] = src_norm[src[e]] * dst_norm[dst[e]] * (w[e] + 1e-9)."""
    n_pad = srcn_ref.shape[0]

    w = w_ref[...] + 1e-9                     # (1, TILE_E)
    src = src_ref[...]
    dst = dst_ref[...]

    node_ids = lax.broadcasted_iota(jnp.int32, (n_pad, 1), 0)

    # Index gather expressed as an inf-safe select + sublane reduction
    # (the norm value is selected, never multiplied by a 0/1 mask, so an inf
    # norm on an unrelated node cannot poison the sum).
    # TODO(synk): switch to jnp.take / tpu dynamic_gather once its lowering
    #             constraints for arbitrary node counts are settled.
    src_norm_e = jnp.sum(
        jnp.where(node_ids == src, srcn_ref[...], 0.0), axis=0, keepdims=True)
    dst_norm_e = jnp.sum(
        jnp.where(node_ids == dst, dstn_ref[...], 0.0), axis=0, keepdims=True)

    out_ref[...] = src_norm_e * dst_norm_e * w


def edge_weight_norm(src, dst, edge_weight, num_nodes, *, norm="both", eps=0.0,
                     tile_e=512):
    """Pallas EdgeWeightNorm. src/dst/edge_weight are 1-D [E] arrays."""
    if norm != "both":
        # TODO(synk): 'right' / 'none' branches of DGL EdgeWeightNorm not implemented.
        raise NotImplementedError("only norm='both' is implemented")
    if edge_weight.ndim != 1:
        raise ValueError("normalization only defined on scalar edge weight")

    E = edge_weight.shape[0]
    tile_e = max(128, _round_up(int(tile_e), 128))
    e_pad = _round_up(max(E, tile_e), tile_e)
    n_pad = _round_up(max(int(num_nodes), 8), 8)
    num_tiles = e_pad // tile_e
    # TODO(synk): tile the node dimension for graphs where (n_pad, tile_e)
    #             intermediates no longer fit comfortably in VMEM.

    # Tail padding: padded edges get weight 0 and dummy index -1 so they
    # contribute nothing to the degree sums and gather a zero norm.
    src_p = jnp.full((1, e_pad), -1, jnp.int32).at[0, :E].set(src.astype(jnp.int32))
    dst_p = jnp.full((1, e_pad), -1, jnp.int32).at[0, :E].set(dst.astype(jnp.int32))
    w_p = jnp.zeros((1, e_pad), jnp.float32).at[0, :E].set(
        edge_weight.astype(jnp.float32))

    edge_spec = pl.BlockSpec((1, tile_e), lambda e: (0, e))
    node_spec = pl.BlockSpec((n_pad, 1), lambda e: (0, 0))   # resident block
    vmem_limit = 32 * 1024 * 1024

    # Pass 1: weighted degrees -> norms (accumulator over an 'arbitrary' axis).
    src_norm, dst_norm = pl.pallas_call(
        functools.partial(_degree_norm_kernel, eps=float(eps)),
        out_shape=(jax.ShapeDtypeStruct((n_pad, 1), jnp.float32),
                   jax.ShapeDtypeStruct((n_pad, 1), jnp.float32)),
        grid=(num_tiles,),
        in_specs=[edge_spec, edge_spec, edge_spec],
        out_specs=(node_spec, node_spec),
        compiler_params=pltpu.CompilerParams(
            dimension_semantics=("arbitrary",),
            vmem_limit_bytes=vmem_limit),
    )(src_p, dst_p, w_p)

    # Pass 2: gather norms per edge and scale the weights ('parallel' axis).
    out = pl.pallas_call(
        _normalize_edges_kernel,
        out_shape=jax.ShapeDtypeStruct((1, e_pad), jnp.float32),
        grid=(num_tiles,),
        in_specs=[node_spec, node_spec, edge_spec, edge_spec, edge_spec],
        out_specs=edge_spec,
        compiler_params=pltpu.CompilerParams(
            dimension_semantics=("parallel",),
            vmem_limit_bytes=vmem_limit),
    )(src_norm, dst_norm, src_p, dst_p, w_p)

    return out[0, :E]


def _reference(src, dst, edge_weight, num_nodes, eps=0.0):
    w = edge_weight.astype(jnp.float32) + 1e-9
    out_w = jnp.zeros((num_nodes,), jnp.float32).at[src].add(w)
    in_w = jnp.zeros((num_nodes,), jnp.float32).at[dst].add(w)
    src_norm = (out_w + eps) ** -0.5
    dst_norm = (in_w + eps) ** -0.5
    return src_norm[src] * dst_norm[dst] * w


if __name__ == "__main__":
    key = jax.random.PRNGKey(0)
    k_src, k_dst, k_w = jax.random.split(key, 3)

    NUM_NODES = 64   # nodes 60..63 are left isolated -> exercises the inf/NaN fix
    NUM_EDGES = 500  # not a multiple of the edge tile -> exercises tail masking

    src = jax.random.randint(k_src, (NUM_EDGES,), 0, NUM_NODES - 4, dtype=jnp.int32)
    dst = jax.random.randint(k_dst, (NUM_EDGES,), 0, NUM_NODES - 4, dtype=jnp.int32)
    # norm='both' requires non-negative edge weights.
    edge_weight = jax.random.uniform(
        k_w, (NUM_EDGES,), dtype=jnp.float32, minval=0.1, maxval=2.0)

    out = edge_weight_norm(src, dst, edge_weight, NUM_NODES,
                           norm="both", eps=0.0, tile_e=256)
    out = jax.block_until_ready(out)

    ref = _reference(src, dst, edge_weight, NUM_NODES, eps=0.0)
    if not bool(jnp.all(jnp.isfinite(out))):
        raise AssertionError("non-finite values in Pallas EdgeWeightNorm output")
    if not jnp.allclose(out, ref, rtol=1e-5, atol=1e-6):
        raise AssertionError("Pallas EdgeWeightNorm mismatch vs reference")

    print("KERNEL_OK")
</pallas_src>

<mosaic_0001>
module attributes {stable_mosaic.version = 11 : i64} {
  func.func @_degree_norm_kernel(%arg0: i32, %arg1: memref<1x256xi32, #tpu.memory_space<vmem>>, %arg2: memref<1x256xi32, #tpu.memory_space<vmem>>, %arg3: memref<1x256xf32, #tpu.memory_space<vmem>>, %arg4: memref<64x1xf32, #tpu.memory_space<vmem>>, %arg5: memref<64x1xf32, #tpu.memory_space<vmem>>) attributes {dimension_semantics = [#tpu.dimension_semantics<arbitrary>], iteration_bounds = array<i64: 2>, scalar_prefetch = 0 : i64, scratch_operands = 0 : i64, tpu.core_type = #tpu.core_type<tc>, window_params = [{transform_indices = @transform_0, window_bounds = array<i64: 1, 256>}, {transform_indices = @transform_1, window_bounds = array<i64: 1, 256>}, {transform_indices = @transform_2, window_bounds = array<i64: 1, 256>}, {pipeline_mode = #tpu.pipeline_mode<synchronous>, transform_indices = @transform_3, window_bounds = array<i64: 64, 1>}, {pipeline_mode = #tpu.pipeline_mode<synchronous>, transform_indices = @transform_4, window_bounds = array<i64: 64, 1>}]} {
    %c0_i32 = arith.constant 0 : i32
    %0 = arith.cmpi eq, %arg0, %c0_i32 : i32
    %1 = arith.extui %0 : i1 to i32
    %c0_i32_0 = arith.constant 0 : i32
    %2 = arith.cmpi ne, %1, %c0_i32_0 : i32
    scf.if %2 {
      %cst_19 = arith.constant 0.000000e+00 : f32
      %36 = vector.broadcast %cst_19 : f32 to vector<64x1xf32>
      %c0_20 = arith.constant 0 : index
      %c0_21 = arith.constant 0 : index
      %37 = vector.load %arg4[%c0_20, %c0_21] : memref<64x1xf32, #tpu.memory_space<vmem>>, vector<64x1xf32>
      tpu.vector_store %arg4[%c0_20, %c0_21], %36 {strides = array<i32>} : memref<64x1xf32, #tpu.memory_space<vmem>>, vector<64x1xf32>,
      %cst_22 = arith.constant 0.000000e+00 : f32
      %38 = vector.broadcast %cst_22 : f32 to vector<64x1xf32>
      %c0_23 = arith.constant 0 : index
      %c0_24 = arith.constant 0 : index
      %39 = vector.load %arg5[%c0_23, %c0_24] : memref<64x1xf32, #tpu.memory_space<vmem>>, vector<64x1xf32>
      tpu.vector_store %arg5[%c0_23, %c0_24], %38 {strides = array<i32>} : memref<64x1xf32, #tpu.memory_space<vmem>>, vector<64x1xf32>,
    } else {
    }
    %c0 = arith.constant 0 : index
    %c0_1 = arith.constant 0 : index
    %3 = vector.load %arg3[%c0, %c0_1] : memref<1x256xf32, #tpu.memory_space<vmem>>, vector<1x256xf32>
    %cst = arith.constant 9.99999971E-10 : f32
    %4 = vector.broadcast %cst : f32 to vector<1x256xf32>
    %5 = arith.addf %3, %4 : vector<1x256xf32>
    %c0_2 = arith.constant 0 : index
    %c0_3 = arith.constant 0 : index
    %6 = vector.load %arg1[%c0_2, %c0_3] : memref<1x256xi32, #tpu.memory_space<vmem>>, vector<1x256xi32>
    %c0_4 = arith.constant 0 : index
    %c0_5 = arith.constant 0 : index
    %7 = vector.load %arg2[%c0_4, %c0_5] : memref<1x256xi32, #tpu.memory_space<vmem>>, vector<1x256xi32>
    %8 = tpu.iota {dimensions = array<i32: 0>} : vector<64x1xi32>
    %c0_6 = arith.constant 0 : index
    %c0_7 = arith.constant 0 : index
    %9 = vector.load %arg4[%c0_6, %c0_7] : memref<64x1xf32, #tpu.memory_space<vmem>>, vector<64x1xf32>
    %10 = vector.broadcast %8 : vector<64x1xi32> to vector<64x256xi32>
    %11 = vector.broadcast %6 : vector<1x256xi32> to vector<64x256xi32>
    %12 = arith.cmpi eq, %10, %11 : vector<64x256xi32>
    %cst_8 = arith.constant 0.000000e+00 : f32
    %13 = vector.shape_cast %5 : vector<1x256xf32> to vector<1x256xf32>
    %14 = vector.broadcast %13 : vector<1x256xf32> to vector<64x256xf32>
    %15 = vector.broadcast %cst_8 : f32 to vector<64x256xf32>
    %16 = arith.select %12, %14, %15 : vector<64x256xi1>, vector<64x256xf32>
    %cst_9 = arith.constant dense<0.000000e+00> : vector<64xf32>
    %17 = vector.multi_reduction <add>, %16, %cst_9 [1] : vector<64x256xf32> to vector<64xf32>
    %18 = vector.shape_cast %17 : vector<64xf32> to vector<64x1xf32>
    %19 = arith.addf %9, %18 : vector<64x1xf32>
    %c0_10 = arith.constant 0 : index
    %c0_11 = arith.constant 0 : index
    %20 = vector.load %arg4[%c0_10, %c0_11] : memref<64x1xf32, #tpu.memory_space<vmem>>, vector<64x1xf32>
    tpu.vector_store %arg4[%c0_10, %c0_11], %19 {strides = array<i32>} : memref<64x1xf32, #tpu.memory_space<vmem>>, vector<64x1xf32>,
    %c0_12 = arith.constant 0 : index
    %c0_13 = arith.constant 0 : index
    %21 = vector.load %arg5[%c0_12, %c0_13] : memref<64x1xf32, #tpu.memory_space<vmem>>, vector<64x1xf32>
    %22 = vector.broadcast %8 : vector<64x1xi32> to vector<64x256xi32>
    %23 = vector.broadcast %7 : vector<1x256xi32> to vector<64x256xi32>
    %24 = arith.cmpi eq, %22, %23 : vector<64x256xi32>
    %cst_14 = arith.constant 0.000000e+00 : f32
    %25 = vector.shape_cast %5 : vector<1x256xf32> to vector<1x256xf32>
    %26 = vector.broadcast %25 : vector<1x256xf32> to vector<64x256xf32>
    %27 = vector.broadcast %cst_14 : f32 to vector<64x256xf32>
    %28 = arith.select %24, %26, %27 : vector<64x256xi1>, vector<64x256xf32>
    %cst_15 = arith.constant dense<0.000000e+00> : vector<64xf32>
    %29 = vector.multi_reduction <add>, %28, %cst_15 [1] : vector<64x256xf32> to vector<64xf32>
    %30 = vector.shape_cast %29 : vector<64xf32> to vector<64x1xf32>
    %31 = arith.addf %21, %30 : vector<64x1xf32>
    %c0_16 = arith.constant 0 : index
    %c0_17 = arith.constant 0 : index
    %32 = vector.load %arg5[%c0_16, %c0_17] : memref<64x1xf32, #tpu.memory_space<vmem>>, vector<64x1xf32>
    tpu.vector_store %arg5[%c0_16, %c0_17], %31 {strides = array<i32>} : memref<64x1xf32, #tpu.memory_space<vmem>>, vector<64x1xf32>,
    %c1_i32 = arith.constant 1 : i32
    %33 = arith.cmpi eq, %arg0, %c1_i32 : i32
    %34 = arith.extui %33 : i1 to i32
    %c0_i32_18 = arith.constant 0 : i32
    %35 = arith.cmpi ne, %34, %c0_i32_18 : i32
    scf.if %35 {
      %c0_19 = arith.constant 0 : index
      %c0_20 = arith.constant 0 : index
      %36 = vector.load %arg4[%c0_19, %c0_20] : memref<64x1xf32, #tpu.memory_space<vmem>>, vector<64x1xf32>
      %cst_21 = arith.constant 0.000000e+00 : f32
      %37 = vector.broadcast %cst_21 : f32 to vector<64x1xf32>
      %38 = arith.addf %36, %37 : vector<64x1xf32>
      %c0_22 = arith.constant 0 : index
      %c0_23 = arith.constant 0 : index
      %39 = vector.load %arg5[%c0_22, %c0_23] : memref<64x1xf32, #tpu.memory_space<vmem>>, vector<64x1xf32>
      %cst_24 = arith.constant 0.000000e+00 : f32
      %40 = vector.broadcast %cst_24 : f32 to vector<64x1xf32>
      %41 = arith.addf %39, %40 : vector<64x1xf32>
      %cst_25 = arith.constant 0.000000e+00 : f32
      %42 = vector.broadcast %cst_25 : f32 to vector<64x1xf32>
      %43 = arith.cmpf ogt, %38, %42 : vector<64x1xf32>
      %44 = math.rsqrt %38 : vector<64x1xf32>
      %cst_26 = arith.constant 0.000000e+00 : f32
      %45 = vector.broadcast %cst_26 : f32 to vector<64x1xf32>
      %46 = arith.select %43, %44, %45 : vector<64x1xi1>, vector<64x1xf32>
      %c0_27 = arith.constant 0 : index
      %c0_28 = arith.constant 0 : index
      %47 = vector.load %arg4[%c0_27, %c0_28] : memref<64x1xf32, #tpu.memory_space<vmem>>, vector<64x1xf32>
      tpu.vector_store %arg4[%c0_27, %c0_28], %46 {strides = array<i32>} : memref<64x1xf32, #tpu.memory_space<vmem>>, vector<64x1xf32>,
      %cst_29 = arith.constant 0.000000e+00 : f32
      %48 = vector.broadcast %cst_29 : f32 to vector<64x1xf32>
      %49 = arith.cmpf ogt, %41, %48 : vector<64x1xf32>
      %50 = math.rsqrt %41 : vector<64x1xf32>
      %cst_30 = arith.constant 0.000000e+00 : f32
      %51 = vector.broadcast %cst_30 : f32 to vector<64x1xf32>
      %52 = arith.select %49, %50, %51 : vector<64x1xi1>, vector<64x1xf32>
      %c0_31 = arith.constant 0 : index
      %c0_32 = arith.constant 0 : index
      %53 = vector.load %arg5[%c0_31, %c0_32] : memref<64x1xf32, #tpu.memory_space<vmem>>, vector<64x1xf32>
      tpu.vector_store %arg5[%c0_31, %c0_32], %52 {strides = array<i32>} : memref<64x1xf32, #tpu.memory_space<vmem>>, vector<64x1xf32>,
    } else {
    }
    return
  }
  func.func @transform_0(%arg0: i32) -> (i32, i32) {
    %c0_i32 = arith.constant 0 : i32
    %c0_i32_0 = arith.constant 0 : i32
    return %c0_i32, %arg0 : i32, i32
  }
  func.func @transform_1(%arg0: i32) -> (i32, i32) {
    %c0_i32 = arith.constant 0 : i32
    %c0_i32_0 = arith.constant 0 : i32
    return %c0_i32, %arg0 : i32, i32
  }
  func.func @transform_2(%arg0: i32) -> (i32, i32) {
    %c0_i32 = arith.constant 0 : i32
    %c0_i32_0 = arith.constant 0 : i32
    return %c0_i32, %arg0 : i32, i32
  }
  func.func @transform_3(%arg0: i32) -> (i32, i32) {
    %c0_i32 = arith.constant 0 : i32
    %c0_i32_0 = arith.constant 0 : i32
    %c0_i32_1 = arith.constant 0 : i32
    return %c0_i32, %c0_i32_0 : i32, i32
  }
  func.func @transform_4(%arg0: i32) -> (i32, i32) {
    %c0_i32 = arith.constant 0 : i32
    %c0_i32_0 = arith.constant 0 : i32
    %c0_i32_1 = arith.constant 0 : i32
    return %c0_i32, %c0_i32_0 : i32, i32
  }
}

</mosaic_0001>

<llo_original>
// kernel: tpu_custom_call.1
$region0: #{tpu_custom_call.1}
  #allocation0 [shape = 'u32[]', space=smem, size = 0x4, offset = 0x4, fixed_abs, tag = 'smem constant byte address 0x4 - core index']
  #allocation1 [shape = 'u32[144,128]{1,0:T(1,128)}', space=vmem, size = 0x12000, scoped, tag = 'internal scratch']
  %s0 = inlined_call_operand.hbm [shape: s32[1,512], index: 0, kind: input, shape index: {}]
  %s1 = inlined_call_operand.hbm [shape: s32[1,512], index: 1, kind: input, shape index: {}]
  %s2 = inlined_call_operand.vmem [shape: f32[1,512], index: 2, kind: input, shape index: {}]
  %s3 = inlined_call_operand.vmem [shape: f32[64,1], index: 3, kind: output, shape index: {0}]
  %s4 = inlined_call_operand.vmem [shape: f32[64,1], index: 4, kind: output, shape index: {1}]
  %5 = xla_tuple %s3, %s4
  %s6 = sld [smem:[#allocation0]]
  $region69: #{tpu_custom_call.1} parent=0
    _
  %s8 = ssub.s32 1, %s6
  %s9 = scalar_select 0, %s8, %s6
  $region1: #{tpu_custom_call.1} parent=0
    #allocation2 [shape = 'u8[2048]{0}', space=vmem, size = 0x800, scoped, tag = 'input window, operand 0']
    #allocation3 [shape = 's32[2]{0}', space=sflag, size = 0x8, scoped, tag = 'scoped memory for tpu_custom_call.1']
    #allocation4 [shape = 'u8[2048]{0}', space=vmem, size = 0x800, scoped, tag = 'input window, operand 1']
    #allocation5 [shape = 's32[2]{0}', space=sflag, size = 0x8, scoped, tag = 'scoped memory for tpu_custom_call.1']
    %10 = vsyncpa [#allocation3], 0
    %s11 = scalar_lea.sflag [#allocation3], 1
    %12 = vsyncpa %s11, 0
    %13 = vsyncpa [#allocation5], 0
    %s14 = scalar_lea.sflag [#allocation5], 1
    %15 = vsyncpa %s14, 0
    loop: start=0, step=1, limit=4
    $region2: #{tpu_custom_call.1} parent=1 // loop_pre_header
      _
    $region3: #{tpu_custom_call.1} parent=1 // loop_header
      %s17 = sphi 0, %s21
      %p18 = scmp.ge.s32.totalorder %s17, 4
      %s27 = sphi 0, %s29
      %s30 = sphi 0, %s27
      %s31 = sphi 0, %s30
      %s47 = sphi 0, %s31
      %s53 = sphi 0, %s55
      %s56 = sphi 0, %s53
      %s57 = sphi 0, %s56
      %s73 = sphi 0, %s57
      %s79 = sphi 0, %s81
      %s82 = sphi 0, %s79
      %s83 = sphi 0, %s82
      %s99 = sphi 0, %s83
      %s103 = sphi 0, %s103
      %s105 = sphi 0, %s103
      %s106 = sphi 0, %s105
      %s120 = sphi 0, %s106
      %s124 = sphi 0, %s124
      %s126 = sphi 0, %s124
      %s127 = sphi 0, %s126
      %s141 = sphi 0, %s127
    $region4: #{tpu_custom_call.1} parent=1 // loop_header_branch
      %20 = sbr.rel (%p18) target = $region8
    $region5: #{tpu_custom_call.1} parent=1 // loop_body
      %s22 = ssub.s32 %s17, 1
      %s23 = ssub.s32 %s17, 2
      %s24 = sadd.s32 %s17, 1
      %s25 = ssub.s32 %s17, %s24
      %p26 = scmp.eq.s32.totalorder %s25, 0
      %s28 = sadd.s32 %s27, 1
      %s29 = scalar_select %p26, %s27, %s28
      %p32 = pneg %p26
      %p33 = scmp.eq.s32.totalorder %s17, 1
      %p34 = por %p32, %p33
      %p35 = scmp.ne.s32.totalorder %s27, %s30
      %p36 = scmp.eq.s32.totalorder %s17, 0
      %p37 = por %p35, %p36
      %p38 = scmp.ne.s32.totalorder %s27, %s30
      %p39 = scmp.eq.s32.totalorder %s22, 1
      %p40 = por %p38, %p39
      %p41 = scmp.ne.s32.totalorder %s30, %s31
      %p42 = scmp.eq.s32.totalorder %s22, 0
      %p43 = por %p41, %p42
      %p44 = scmp.ne.s32.totalorder %s30, %s31
      %p45 = scmp.eq.s32.totalorder %s23, 1
      %p46 = por %p44, %p45
      %p48 = scmp.ne.s32.totalorder %s31, %s47
      %p49 = scmp.eq.s32.totalorder %s23, 0
      %p50 = por %p48, %p49
      %s51 = ssub.s32 %s17, %s24
      %p52 = scmp.eq.s32.totalorder %s51, 0
      %s54 = sadd.s32 %s53, 1
      %s55 = scalar_select %p52, %s53, %s54
      %p58 = pneg %p52
      %p59 = scmp.eq.s32.totalorder %s17, 1
      %p60 = por %p58, %p59
      %p61 = scmp.ne.s32.totalorder %s53, %s56
      %p62 = scmp.eq.s32.totalorder %s17, 0
      %p63 = por %p61, %p62
      %p64 = scmp.ne.s32.totalorder %s53, %s56
      %p65 = scmp.eq.s32.totalorder %s22, 1
      %p66 = por %p64, %p65
      %p67 = scmp.ne.s32.totalorder %s56, %s57
      %p68 = scmp.eq.s32.totalorder %s22, 0
      %p69 = por %p67, %p68
      %p70 = scmp.ne.s32.totalorder %s56, %s57
      %p71 = scmp.eq.s32.totalorder %s23, 1
      %p72 = por %p70, %p71
      %p74 = scmp.ne.s32.totalorder %s57, %s73
      %p75 = scmp.eq.s32.totalorder %s23, 0
      %p76 = por %p74, %p75
      %s77 = ssub.s32 %s17, %s24
      %p78 = scmp.eq.s32.totalorder %s77, 0
      %s80 = sadd.s32 %s79, 1
      %s81 = scalar_select %p78, %s79, %s80
      %p84 = pneg %p78
      %p85 = scmp.eq.s32.totalorder %s17, 1
      %p86 = por %p84, %p85
      %p87 = scmp.ne.s32.totalorder %s79, %s82
      %p88 = scmp.eq.s32.totalorder %s17, 0
      %p89 = por %p87, %p88
      %p90 = scmp.ne.s32.totalorder %s79, %s82
      %p91 = scmp.eq.s32.totalorder %s22, 1
      %p92 = por %p90, %p91
      %p93 = scmp.ne.s32.totalorder %s82, %s83
      %p94 = scmp.eq.s32.totalorder %s22, 0
      %p95 = por %p93, %p94
      %p96 = scmp.ne.s32.totalorder %s82, %s83
      %p97 = scmp.eq.s32.totalorder %s23, 1
      %p98 = por %p96, %p97
      %p100 = scmp.ne.s32.totalorder %s83, %s99
      %p101 = scmp.eq.s32.totalorder %s23, 0
      %p102 = por %p100, %p101
      %s104 = sadd.s32 %s103, 1
      %p107 = scmp.eq.s32.totalorder %s17, 1
      %p108 = scmp.ne.s32.totalorder %s103, %s105
      %p109 = scmp.eq.s32.totalorder %s17, 0
      %p110 = por %p108, %p109
      %p111 = scmp.ne.s32.totalorder %s103, %s105
      %p112 = scmp.eq.s32.totalorder %s22, 1
      %p113 = por %p111, %p112
      %p114 = scmp.ne.s32.totalorder %s105, %s106
      %p115 = scmp.eq.s32.totalorder %s22, 0
      %p116 = por %p114, %p115
      %p117 = scmp.ne.s32.totalorder %s105, %s106
      %p118 = scmp.eq.s32.totalorder %s23, 1
      %p119 = por %p117, %p118
      %p121 = scmp.ne.s32.totalorder %s106, %s120
      %p122 = scmp.eq.s32.totalorder %s23, 0
      %p123 = por %p121, %p122
      %s125 = sadd.s32 %s124, 1
      %p128 = scmp.eq.s32.totalorder %s17, 1
      %p129 = scmp.ne.s32.totalorder %s124, %s126
      %p130 = scmp.eq.s32.totalorder %s17, 0
      %p131 = por %p129, %p130
      %p132 = scmp.ne.s32.totalorder %s124, %s126
      %p133 = scmp.eq.s32.totalorder %s22, 1
      %p134 = por %p132, %p133
      %p135 = scmp.ne.s32.totalorder %s126, %s127
      %p136 = scmp.eq.s32.totalorder %s22, 0
      %p137 = por %p135, %p136
      %p138 = scmp.ne.s32.totalorder %s126, %s127
      %p139 = scmp.eq.s32.totalorder %s23, 1
      %p140 = por %p138, %p139
      %p142 = scmp.ne.s32.totalorder %s127, %s141
      %p143 = scmp.eq.s32.totalorder %s23, 0
      %p144 = por %p142, %p143
      %p145 = scmp.le.s32.totalorder 1, %s17
      %p146 = scmp.lt.s32.totalorder %s17, 3
      %p147 = pnand %p145, %p146
      %p148 = pneg %p147
      // Predicated region
      $region9: #{tpu_custom_call.1} parent=5 // pred_check
        _
      $region10: #{tpu_custom_call.1} parent=5 // pred_check_branch
        %150 = sbr.rel (%p147) target = $region12
      $region11: #{tpu_custom_call.1} parent=5 // pred_region
        %s151 = ssub.s32 %s17, 1
      $region12: #{tpu_custom_call.1} parent=5 // pred_fallthru
        _
      %p152 = scmp.lt.s32.totalorder %s17, 2
      // Predicated region
      $region13: #{tpu_custom_call.1} parent=5 // pred_check
        %p153 = pneg %p152
      $region14: #{tpu_custom_call.1} parent=5 // pred_check_branch
        %155 = sbr.rel (%p153) target = $region16
      $region15: #{tpu_custom_call.1} parent=5 // pred_region
        // Predicated region
        $region17: #{tpu_custom_call.1} parent=15 // pred_check
          %p156 = pneg %p37
        $region18: #{tpu_custom_call.1} parent=15 // pred_check_branch
          %158 = sbr.rel (%p156) target = $region20
        $region19: #{tpu_custom_call.1} parent=15 // pred_region
          %s159 = sand.u32 %s27, 1
          %s160 = scalar_lea.sflag [#allocation3], %s159
          %s161 = sand.u32 %s27, 1
          %s162 = smul.addr %s161, 2
          %s163 = scalar_lea.vmem [#allocation2], %s162
          %s164 = smul.u32 2, %s17
          %s166 = ssub.s32 32, 32
          %167 = vsyncadd %s160, %s166
          %s168 = smul.addr %s164, 16
          %s169 = scalar_lea.hbm %s0, %s168
          %s171 = sshll.u32 %s163, 4
          %s172 = int_to_ptr.vmem [resolvable:$true] %s171
          %174 = dma.hbm_to_vmem [thread:$0]  %s169, 32, %s172, %s160
        $region20: #{tpu_custom_call.1} parent=15 // pred_fallthru
          _
        // Predicated region
        $region21: #{tpu_custom_call.1} parent=15 // pred_check
          %p175 = pneg %p63
        $region22: #{tpu_custom_call.1} parent=15 // pred_check_branch
          %177 = sbr.rel (%p175) target = $region24
        $region23: #{tpu_custom_call.1} parent=15 // pred_region
          %s178 = sand.u32 %s53, 1
          %s179 = scalar_lea.sflag [#allocation5], %s178
          %s180 = sand.u32 %s53, 1
          %s181 = smul.addr %s180, 2
          %s182 = scalar_lea.vmem [#allocation4], %s181
          %s183 = smul.u32 2, %s17
          %s185 = ssub.s32 32, 32
          %186 = vsyncadd %s179, %s185
          %s187 = smul.addr %s183, 16
          %s188 = scalar_lea.hbm %s1, %s187
          %s190 = sshll.u32 %s182, 4
          %s191 = int_to_ptr.vmem [resolvable:$true] %s190
          %193 = dma.hbm_to_vmem [thread:$0]  %s188, 32, %s191, %s179
        $region24: #{tpu_custom_call.1} parent=15 // pred_fallthru
          _
        // Predicated region
        $region25: #{tpu_custom_call.1} parent=15 // pred_check
          %p194 = pneg %p89
        $region26: #{tpu_custom_call.1} parent=15 // pred_check_branch
          %196 = sbr.rel (%p194) target = $region28
        $region27: #{tpu_custom_call.1} parent=15 // pred_region
          %s197 = smul.u32 2, %s17
          %p198 = scmp.lt.s32.totalorder %s197, 3
          %s199 = scalar_select %p198, %s197, 3
          %s200 = scalar_lea.vmem %s2, %s199
          %s201 = smul.u32 2, %s17
        $region28: #{tpu_custom_call.1} parent=15 // pred_fallthru
          _
      $region16: #{tpu_custom_call.1} parent=5 // pred_fallthru
        _
      %p202 = scmp.le.s32.totalorder 1, %s17
      %p203 = scmp.lt.s32.totalorder %s17, 3
      %p204 = pnand %p202, %p203
      %p205 = pneg %p204
      // Predicated region
      $region29: #{tpu_custom_call.1} parent=5 // pred_check
        _
      $region30: #{tpu_custom_call.1} parent=5 // pred_check_branch
        %207 = sbr.rel (%p204) target = $region32
      $region31: #{tpu_custom_call.1} parent=5 // pred_region
        %s208 = ssub.s32 %s17, 1
        %s209 = sand.u32 %s30, 1
        %s210 = scalar_lea.sflag [#allocation3], %s209
        %s211 = sand.u32 %s30, 1
        %s212 = smul.addr %s211, 2
        %s213 = scalar_lea.vmem [#allocation2], %s212
        // Predicated region
        $region33: #{tpu_custom_call.1} parent=31 // pred_check
          %p214 = pneg %p43
        $region34: #{tpu_custom_call.1} parent=31 // pred_check_branch
          %216 = sbr.rel (%p214) target = $region36
        $region35: #{tpu_custom_call.1} parent=31 // pred_region
          %217 = dma.done %s210, 32
        $region36: #{tpu_custom_call.1} parent=31 // pred_fallthru
          _
        %s218 = sand.u32 %s56, 1
        %s219 = scalar_lea.sflag [#allocation5], %s218
        %s220 = sand.u32 %s56, 1
        %s221 = smul.addr %s220, 2
        %s222 = scalar_lea.vmem [#allocation4], %s221
        // Predicated region
        $region37: #{tpu_custom_call.1} parent=31 // pred_check
          %p223 = pneg %p69
        $region38: #{tpu_custom_call.1} parent=31 // pred_check_branch
          %225 = sbr.rel (%p223) target = $region40
        $region39: #{tpu_custom_call.1} parent=31 // pred_region
          %226 = dma.done %s219, 32
        $region40: #{tpu_custom_call.1} parent=31 // pred_fallthru
          _
        %s227 = sand.u32 %s30, 1
        %s228 = scalar_lea.sflag [#allocation3], %s227
        %s229 = sand.u32 %s30, 1
        %s230 = smul.addr %s229, 2
        %s231 = scalar_lea.vmem [#allocation2], %s230
        %p232 = pneg %p43
        %p233 = pneg %p40
        %s234 = sand.u32 %s56, 1
        %s235 = scalar_lea.sflag [#allocation5], %s234
        %s236 = sand.u32 %s56, 1
        %s237 = smul.addr %s236, 2
        %s238 = scalar_lea.vmem [#allocation4], %s237
        %p239 = pneg %p69
        %p240 = pneg %p66
        %s241 = smul.u32 2, %s22
        %p242 = scmp.lt.s32.totalorder %s241, 3
        %s243 = scalar_select %p242, %s241, 3
        %s244 = scalar_lea.vmem %s2, %s243
        %p245 = pneg %p95
        %p246 = pneg %p92
        %p247 = pneg %p116
        %p248 = pneg %p113
        %p249 = pneg %p137
        %p250 = pneg %p134
        %s251 = smul.u32 2, %s22
        %s252 = smul.u32 2, %s22
        %s253 = smul.u32 2, %s22
        %p254 = scmp.lt.s32.totalorder %s253, 3
        %s255 = scalar_select %p254, %s253, 3
        %s256 = scalar_lea.vmem %s2, %s255
        %s257 = smul.u32 2, %s22
        %p258 = scmp.eq.s32.totalorder %s22, 0
        // Predicated region
        $region41: #{tpu_custom_call.1} parent=31 // pred_check
          %p259 = pneg %p258
        $region42: #{tpu_custom_call.1} parent=31 // pred_check_branch
          %261 = sbr.rel (%p259) target = $region44
        $region43: #{tpu_custom_call.1} parent=31 // pred_region
          %vm262 = vcmask 7168
          %263 = vst.msk [vmem:[%s3] sm:$0xff] %vm262, 0.0
          %264 = vst.msk [vmem:[%s3 + $0x8] sm:$0xff] %vm262, 0.0
          %265 = vst.msk [vmem:[%s3 + $0x10] sm:$0xff] %vm262, 0.0
          %266 = vst.msk [vmem:[%s3 + $0x18] sm:$0xff] %vm262, 0.0
          %267 = vst.msk [vmem:[%s3 + $0x20] sm:$0xff] %vm262, 0.0
          %268 = vst.msk [vmem:[%s3 + $0x28] sm:$0xff] %vm262, 0.0
          %269 = vst.msk [vmem:[%s3 + $0x30] sm:$0xff] %vm262, 0.0
          %270 = vst.msk [vmem:[%s3 + $0x38] sm:$0xff] %vm262, 0.0
          %271 = vst.msk [vmem:[%s4] sm:$0xff] %vm262, 0.0
          %272 = vst.msk [vmem:[%s4 + $0x8] sm:$0xff] %vm262, 0.0
          %273 = vst.msk [vmem:[%s4 + $0x10] sm:$0xff] %vm262, 0.0
          %274 = vst.msk [vmem:[%s4 + $0x18] sm:$0xff] %vm262, 0.0
          %275 = vst.msk [vmem:[%s4 + $0x20] sm:$0xff] %vm262, 0.0
          %276 = vst.msk [vmem:[%s4 + $0x28] sm:$0xff] %vm262, 0.0
          %277 = vst.msk [vmem:[%s4 + $0x30] sm:$0xff] %vm262, 0.0
          %278 = vst.msk [vmem:[%s4 + $0x38] sm:$0xff] %vm262, 0.0
        $region44: #{tpu_custom_call.1} parent=31 // pred_fallthru
          _
        %v279 = vld [vmem:[%s256] sm:$0x3]
        %v280 = vadd.f32 %v279, 1e-09
        %v281 = vld [vmem:[%s213] sm:$0x3]
        %v282 = vld [vmem:[%s222] sm:$0x3]
        %v283 = vlaneseq
        %v284 = vshrl.u32 %v283, 7
        %v285 = vadd.s32 %v284, 8
        %v286 = vadd.s32 %v284, 16
        %v287 = vadd.s32 %v284, 24
        %v288 = vadd.s32 %v284, 32
        %v289 = vadd.s32 %v284, 40
        %v290 = vadd.s32 %v284, 48
        %v291 = vadd.s32 %v284, 56
        %v292 = vld [vmem:[%s3] sm:$0xff]
        %v293 = vld [vmem:[%s3 + $0x8] sm:$0xff]
        %v294 = vld [vmem:[%s3 + $0x10] sm:$0xff]
        %v295 = vld [vmem:[%s3 + $0x18] sm:$0xff]
        %v296 = vld [vmem:[%s3 + $0x20] sm:$0xff]
        %v297 = vld [vmem:[%s3 + $0x28] sm:$0xff]
        %v298 = vld [vmem:[%s3 + $0x30] sm:$0xff]
        %v299 = vld [vmem:[%s3 + $0x38] sm:$0xff]
        %v300 = vlaneseq
        %v301 = vshrl.u32 %v300, 7
        %v302 = vsub.s32 0, %v301
        %v303 = vrot.slane %v281, %v302
        %v304 = vlaneseq
        %v305 = vshrl.u32 %v304, 7
        %v306 = vsub.s32 1, %v305
        %v307 = vrot.slane %v281, %v306
        %vm308 = vcmp.eq.s32.totalorder %v284, %v303
        %vm309 = vcmp.eq.s32.totalorder %v284, %v307
        %vm310 = vcmp.eq.s32.totalorder %v285, %v303
        %vm311 = vcmp.eq.s32.totalorder %v285, %v307
        %vm312 = vcmp.eq.s32.totalorder %v286, %v303
        %vm313 = vcmp.eq.s32.totalorder %v286, %v307
        %vm314 = vcmp.eq.s32.totalorder %v287, %v303
        %vm315 = vcmp.eq.s32.totalorder %v287, %v307
        %vm316 = vcmp.eq.s32.totalorder %v288, %v303
        %vm317 = vcmp.eq.s32.totalorder %v288, %v307
        %vm318 = vcmp.eq.s32.totalorder %v289, %v303
        %vm319 = vcmp.eq.s32.totalorder %v289, %v307
        %vm320 = vcmp.eq.s32.totalorder %v290, %v303
        %vm321 = vcmp.eq.s32.totalorder %v290, %v307
        %vm322 = vcmp.eq.s32.totalorder %v291, %v303
        %vm323 = vcmp.eq.s32.totalorder %v291, %v307
        %v325 = vlaneseq
        %v326 = vshrl.u32 %v325, 7
        %v327 = vsub.s32 0, %v326
        %v328 = vrot.slane %v280, %v327
        %v329 = vlaneseq
        %v330 = vshrl.u32 %v329, 7
        %v331 = vsub.s32 1, %v330
        %v332 = vrot.slane %v280, %v331
        %v335 = vsel %vm308, %v328, 0.0
        %v336 = vsel %vm309, %v332, 0.0
        %v337 = vsel %vm310, %v328, 0.0
        %v338 = vsel %vm311, %v332, 0.0
        %v339 = vsel %vm312, %v328, 0.0
        %v340 = vsel %vm313, %v332, 0.0
        %v341 = vsel %vm314, %v328, 0.0
        %v342 = vsel %vm315, %v332, 0.0
        %v343 = vsel %vm316, %v328, 0.0
        %v344 = vsel %vm317, %v332, 0.0
        %v345 = vsel %vm318, %v328, 0.0
        %v346 = vsel %vm319, %v332, 0.0
        %v347 = vsel %vm320, %v328, 0.0
        %v348 = vsel %vm321, %v332, 0.0
        %v349 = vsel %vm322, %v328, 0.0
        %v350 = vsel %vm323, %v332, 0.0
        %v351 = vadd.f32 %v335, %v336
        %352 = vadd.xlane.f32.xlu0 %v351
        %v353 = vpop.xlane.xlu0 %352
        %v354 = vadd.f32 %v337, %v338
        %355 = vadd.xlane.f32.xlu0 %v354
        %v356 = vpop.xlane.xlu0 %355
        %v357 = vadd.f32 %v339, %v340
        %358 = vadd.xlane.f32.xlu0 %v357
        %v359 = vpop.xlane.xlu0 %358
        %v360 = vadd.f32 %v341, %v342
        %361 = vadd.xlane.f32.xlu0 %v360
        %v362 = vpop.xlane.xlu0 %361
        %v363 = vadd.f32 %v343, %v344
        %364 = vadd.xlane.f32.xlu0 %v363
        %v365 = vpop.xlane.xlu0 %364
        %v366 = vadd.f32 %v345, %v346
        %367 = vadd.xlane.f32.xlu0 %v366
        %v368 = vpop.xlane.xlu0 %367
        %v369 = vadd.f32 %v347, %v348
        %370 = vadd.xlane.f32.xlu0 %v369
        %v371 = vpop.xlane.xlu0 %370
        %v372 = vadd.f32 %v349, %v350
        %373 = vadd.xlane.f32.xlu0 %v372
        %v374 = vpop.xlane.xlu0 %373
        %v375 = vadd.f32 %v292, %v353
        %v376 = vadd.f32 %v293, %v356
        %v377 = vadd.f32 %v294, %v359
        %v378 = vadd.f32 %v295, %v362
        %v379 = vadd.f32 %v296, %v365
        %v380 = vadd.f32 %v297, %v368
        %v381 = vadd.f32 %v298, %v371
        %v382 = vadd.f32 %v299, %v374
        %vm383 = vcmask 7168
        %384 = vst.msk [vmem:[%s3] sm:$0xff] %vm383, %v375
        %385 = vst.msk [vmem:[%s3 + $0x8] sm:$0xff] %vm383, %v376
        %386 = vst.msk [vmem:[%s3 + $0x10] sm:$0xff] %vm383, %v377
        %387 = vst.msk [vmem:[%s3 + $0x18] sm:$0xff] %vm383, %v378
        %388 = vst.msk [vmem:[%s3 + $0x20] sm:$0xff] %vm383, %v379
        %389 = vst.msk [vmem:[%s3 + $0x28] sm:$0xff] %vm383, %v380
        %390 = vst.msk [vmem:[%s3 + $0x30] sm:$0xff] %vm383, %v381
        %391 = vst.msk [vmem:[%s3 + $0x38] sm:$0xff] %vm383, %v382
        %v392 = vld [vmem:[%s4] sm:$0xff]
        %v393 = vld [vmem:[%s4 + $0x8] sm:$0xff]
        %v394 = vld [vmem:[%s4 + $0x10] sm:$0xff]
        %v395 = vld [vmem:[%s4 + $0x18] sm:$0xff]
        %v396 = vld [vmem:[%s4 + $0x20] sm:$0xff]
        %v397 = vld [vmem:[%s4 + $0x28] sm:$0xff]
        %v398 = vld [vmem:[%s4 + $0x30] sm:$0xff]
        %v399 = vld [vmem:[%s4 + $0x38] sm:$0xff]
        %v400 = vlaneseq
        %v401 = vshrl.u32 %v400, 7
        %v402 = vsub.s32 0, %v401
        %v403 = vrot.slane %v282, %v402
        %v404 = vlaneseq
        %v405 = vshrl.u32 %v404, 7
        %v406 = vsub.s32 1, %v405
        %v407 = vrot.slane %v282, %v406
        %vm408 = vcmp.eq.s32.totalorder %v284, %v403
        %vm409 = vcmp.eq.s32.totalorder %v284, %v407
        %vm410 = vcmp.eq.s32.totalorder %v285, %v403
        %vm411 = vcmp.eq.s32.totalorder %v285, %v407
        %vm412 = vcmp.eq.s32.totalorder %v286, %v403
        %vm413 = vcmp.eq.s32.totalorder %v286, %v407
        %vm414 = vcmp.eq.s32.totalorder %v287, %v403
        %vm415 = vcmp.eq.s32.totalorder %v287, %v407
        %vm416 = vcmp.eq.s32.totalorder %v288, %v403
        %vm417 = vcmp.eq.s32.totalorder %v288, %v407
        %vm418 = vcmp.eq.s32.totalorder %v289, %v403
        %vm419 = vcmp.eq.s32.totalorder %v289, %v407
        %vm420 = vcmp.eq.s32.totalorder %v290, %v403
        %vm421 = vcmp.eq.s32.totalorder %v290, %v407
        %vm422 = vcmp.eq.s32.totalorder %v291, %v403
        %vm423 = vcmp.eq.s32.totalorder %v291, %v407
        %v424 = vsel %vm408, %v328, 0.0
        %v425 = vsel %vm409, %v332, 0.0
        %v426 = vsel %vm410, %v328, 0.0
        %v427 = vsel %vm411, %v332, 0.0
        %v428 = vsel %vm412, %v328, 0.0
        %v429 = vsel %vm413, %v332, 0.0
        %v430 = vsel %vm414, %v328, 0.0
        %v431 = vsel %vm415, %v332, 0.0
        %v432 = vsel %vm416, %v328, 0.0
        %v433 = vsel %vm417, %v332, 0.0
        %v434 = vsel %vm418, %v328, 0.0
        %v435 = vsel %vm419, %v332, 0.0
        %v436 = vsel %vm420, %v328, 0.0
        %v437 = vsel %vm421, %v332, 0.0
        %v438 = vsel %vm422, %v328, 0.0
        %v439 = vsel %vm423, %v332, 0.0
        %v440 = vadd.f32 %v424, %v425
        %441 = vadd.xlane.f32.xlu0 %v440
        %v442 = vpop.xlane.xlu0 %441
        %v443 = vadd.f32 %v426, %v427
        %444 = vadd.xlane.f32.xlu0 %v443
        %v445 = vpop.xlane.xlu0 %444
        %v446 = vadd.f32 %v428, %v429
        %447 = vadd.xlane.f32.xlu0 %v446
        %v448 = vpop.xlane.xlu0 %447
        %v449 = vadd.f32 %v430, %v431
        %450 = vadd.xlane.f32.xlu0 %v449
        %v451 = vpop.xlane.xlu0 %450
        %v452 = vadd.f32 %v432, %v433
        %453 = vadd.xlane.f32.xlu0 %v452
        %v454 = vpop.xlane.xlu0 %453
        %v455 = vadd.f32 %v434, %v435
        %456 = vadd.xlane.f32.xlu0 %v455
        %v457 = vpop.xlane.xlu0 %456
        %v458 = vadd.f32 %v436, %v437
        %459 = vadd.xlane.f32.xlu0 %v458
        %v460 = vpop.xlane.xlu0 %459
        %v461 = vadd.f32 %v438, %v439
        %462 = vadd.xlane.f32.xlu0 %v461
        %v463 = vpop.xlane.xlu0 %462
        %v464 = vadd.f32 %v392, %v442
        %v465 = vadd.f32 %v393, %v445
        %v466 = vadd.f32 %v394, %v448
        %v467 = vadd.f32 %v395, %v451
        %v468 = vadd.f32 %v396, %v454
        %v469 = vadd.f32 %v397, %v457
        %v470 = vadd.f32 %v398, %v460
        %v471 = vadd.f32 %v399, %v463
        %472 = vst.msk [vmem:[%s4] sm:$0xff] %vm383, %v464
        %473 = vst.msk [vmem:[%s4 + $0x8] sm:$0xff] %vm383, %v465
        %474 = vst.msk [vmem:[%s4 + $0x10] sm:$0xff] %vm383, %v466
        %475 = vst.msk [vmem:[%s4 + $0x18] sm:$0xff] %vm383, %v467
        %476 = vst.msk [vmem:[%s4 + $0x20] sm:$0xff] %vm383, %v468
        %477 = vst.msk [vmem:[%s4 + $0x28] sm:$0xff] %vm383, %v469
        %478 = vst.msk [vmem:[%s4 + $0x30] sm:$0xff] %vm383, %v470
        %479 = vst.msk [vmem:[%s4 + $0x38] sm:$0xff] %vm383, %v471
        %p480 = scmp.eq.s32.totalorder %s22, 1
        // Predicated region
        $region45: #{tpu_custom_call.1} parent=31 // pred_check
          %p481 = pneg %p480
        $region46: #{tpu_custom_call.1} parent=31 // pred_check_branch
          %483 = sbr.rel (%p481) target = $region48
        $region47: #{tpu_custom_call.1} parent=31 // pred_region
          %v484 = vld [vmem:[%s3] sm:$0xff]
          %v485 = vld [vmem:[%s3 + $0x8] sm:$0xff]
          %v486 = vld [vmem:[%s3 + $0x10] sm:$0xff]
          %v487 = vld [vmem:[%s3 + $0x18] sm:$0xff]
          %v488 = vld [vmem:[%s3 + $0x20] sm:$0xff]
          %v489 = vld [vmem:[%s3 + $0x28] sm:$0xff]
          %v490 = vld [vmem:[%s3 + $0x30] sm:$0xff]
          %v491 = vld [vmem:[%s3 + $0x38] sm:$0xff]
          %v492 = vadd.f32 %v484, 0.0
          %v493 = vadd.f32 %v485, 0.0
          %v494 = vadd.f32 %v486, 0.0
          %v495 = vadd.f32 %v487, 0.0
          %v496 = vadd.f32 %v488, 0.0
          %v497 = vadd.f32 %v489, 0.0
          %v498 = vadd.f32 %v490, 0.0
          %v499 = vadd.f32 %v491, 0.0
          %v500 = vld [vmem:[%s4] sm:$0xff]
          %v501 = vld [vmem:[%s4 + $0x8] sm:$0xff]
          %v502 = vld [vmem:[%s4 + $0x10] sm:$0xff]
          %v503 = vld [vmem:[%s4 + $0x18] sm:$0xff]
          %v504 = vld [vmem:[%s4 + $0x20] sm:$0xff]
          %v505 = vld [vmem:[%s4 + $0x28] sm:$0xff]
          %v506 = vld [vmem:[%s4 + $0x30] sm:$0xff]
          %v507 = vld [vmem:[%s4 + $0x38] sm:$0xff]
          %v508 = vadd.f32 %v500, 0.0
          %v509 = vadd.f32 %v501, 0.0
          %v510 = vadd.f32 %v502, 0.0
          %v511 = vadd.f32 %v503, 0.0
          %v512 = vadd.f32 %v504, 0.0
          %v513 = vadd.f32 %v505, 0.0
          %v514 = vadd.f32 %v506, 0.0
          %v515 = vadd.f32 %v507, 0.0
          %vm516 = vcmp.gt.f32.partialorder %v492, 0.0
          %vm517 = vcmp.gt.f32.partialorder %v493, 0.0
          %vm518 = vcmp.gt.f32.partialorder %v494, 0.0
          %vm519 = vcmp.gt.f32.partialorder %v495, 0.0
          %vm520 = vcmp.gt.f32.partialorder %v496, 0.0
          %vm521 = vcmp.gt.f32.partialorder %v497, 0.0
          %vm522 = vcmp.gt.f32.partialorder %v498, 0.0
          %vm523 = vcmp.gt.f32.partialorder %v499, 0.0
          %v524 = vrsqrt.pop %v492
          %v525 = vrsqrt.pop %v493
          %v526 = vrsqrt.pop %v494
          %v527 = vrsqrt.pop %v495
          %v528 = vrsqrt.pop %v496
          %v529 = vrsqrt.pop %v497
          %v530 = vrsqrt.pop %v498
          %v531 = vrsqrt.pop %v499
          %v532 = vsel %vm516, %v524, 0.0
          %v533 = vsel %vm517, %v525, 0.0
          %v534 = vsel %vm518, %v526, 0.0
          %v535 = vsel %vm519, %v527, 0.0
          %v536 = vsel %vm520, %v528, 0.0
          %v537 = vsel %vm521, %v529, 0.0
          %v538 = vsel %vm522, %v530, 0.0
          %v539 = vsel %vm523, %v531, 0.0
          %540 = vst.msk [vmem:[%s3] sm:$0xff] %vm383, %v532
          %541 = vst.msk [vmem:[%s3 + $0x8] sm:$0xff] %vm383, %v533
          %542 = vst.msk [vmem:[%s3 + $0x10] sm:$0xff] %vm383, %v534
          %543 = vst.msk [vmem:[%s3 + $0x18] sm:$0xff] %vm383, %v535
          %544 = vst.msk [vmem:[%s3 + $0x20] sm:$0xff] %vm383, %v536
          %545 = vst.msk [vmem:[%s3 + $0x28] sm:$0xff] %vm383, %v537
          %546 = vst.msk [vmem:[%s3 + $0x30] sm:$0xff] %vm383, %v538
          %547 = vst.msk [vmem:[%s3 + $0x38] sm:$0xff] %vm383, %v539
          %vm548 = vcmp.gt.f32.partialorder %v508, 0.0
          %vm549 = vcmp.gt.f32.partialorder %v509, 0.0
          %vm550 = vcmp.gt.f32.partialorder %v510, 0.0
          %vm551 = vcmp.gt.f32.partialorder %v511, 0.0
          %vm552 = vcmp.gt.f32.partialorder %v512, 0.0
          %vm553 = vcmp.gt.f32.partialorder %v513, 0.0
          %vm554 = vcmp.gt.f32.partialorder %v514, 0.0
          %vm555 = vcmp.gt.f32.partialorder %v515, 0.0
          %v556 = vrsqrt.pop %v508
          %v557 = vrsqrt.pop %v509
          %v558 = vrsqrt.pop %v510
          %v559 = vrsqrt.pop %v511
          %v560 = vrsqrt.pop %v512
          %v561 = vrsqrt.pop %v513
          %v562 = vrsqrt.pop %v514
          %v563 = vrsqrt.pop %v515
          %v564 = vsel %vm548, %v556, 0.0
          %v565 = vsel %vm549, %v557, 0.0
          %v566 = vsel %vm550, %v558, 0.0
          %v567 = vsel %vm551, %v559, 0.0
          %v568 = vsel %vm552, %v560, 0.0
          %v569 = vsel %vm553, %v561, 0.0
          %v570 = vsel %vm554, %v562, 0.0
          %v571 = vsel %vm555, %v563, 0.0
          %572 = vst.msk [vmem:[%s4] sm:$0xff] %vm383, %v564
          %573 = vst.msk [vmem:[%s4 + $0x8] sm:$0xff] %vm383, %v565
          %574 = vst.msk [vmem:[%s4 + $0x10] sm:$0xff] %vm383, %v566
          %575 = vst.msk [vmem:[%s4 + $0x18] sm:$0xff] %vm383, %v567
          %576 = vst.msk [vmem:[%s4 + $0x20] sm:$0xff] %vm383, %v568
          %577 = vst.msk [vmem:[%s4 + $0x28] sm:$0xff] %vm383, %v569
          %578 = vst.msk [vmem:[%s4 + $0x30] sm:$0xff] %vm383, %v570
          %579 = vst.msk [vmem:[%s4 + $0x38] sm:$0xff] %vm383, %v571
        $region48: #{tpu_custom_call.1} parent=31 // pred_fallthru
          _
        // Predicated region
        $region49: #{tpu_custom_call.1} parent=31 // pred_check
          %p580 = pneg %p113
        $region50: #{tpu_custom_call.1} parent=31 // pred_check_branch
          %582 = sbr.rel (%p580) target = $region52
        $region51: #{tpu_custom_call.1} parent=31 // pred_region
          _
        $region52: #{tpu_custom_call.1} parent=31 // pred_fallthru
          _
        // Predicated region
        $region53: #{tpu_custom_call.1} parent=31 // pred_check
          %p583 = pneg %p134
        $region54: #{tpu_custom_call.1} parent=31 // pred_check_branch
          %585 = sbr.rel (%p583) target = $region56
        $region55: #{tpu_custom_call.1} parent=31 // pred_region
          _
        $region56: #{tpu_custom_call.1} parent=31 // pred_fallthru
          _
        // Predicated region
        $region57: #{tpu_custom_call.1} parent=31 // pred_check
          %p586 = pneg %p113
        $region58: #{tpu_custom_call.1} parent=31 // pred_check_branch
          %588 = sbr.rel (%p586) target = $region60
        $region59: #{tpu_custom_call.1} parent=31 // pred_region
          _
        $region60: #{tpu_custom_call.1} parent=31 // pred_fallthru
          _
        // Predicated region
        $region61: #{tpu_custom_call.1} parent=31 // pred_check
          %p589 = pneg %p134
        $region62: #{tpu_custom_call.1} parent=31 // pred_check_branch
          %591 = sbr.rel (%p589) target = $region64
        $region63: #{tpu_custom_call.1} parent=31 // pred_region
          _
        $region64: #{tpu_custom_call.1} parent=31 // pred_fallthru
          _
      $region32: #{tpu_custom_call.1} parent=5 // pred_fallthru
        _
      %p592 = scmp.le.s32.totalorder 2, %s17
      // Predicated region
      $region65: #{tpu_custom_call.1} parent=5 // pred_check
        %p593 = pneg %p592
      $region66: #{tpu_custom_call.1} parent=5 // pred_check_branch
        %595 = sbr.rel (%p593) target = $region68
      $region67: #{tpu_custom_call.1} parent=5 // pred_region
        %s596 = ssub.s32 %s17, 2
      $region68: #{tpu_custom_call.1} parent=5 // pred_fallthru
        _
    $region6: #{tpu_custom_call.1} parent=1 // loop_footer
      %s21 = sadd.s32 1, %s17
    $region7: #{tpu_custom_call.1} parent=1 // loop_footer_branch
      %16 = sbr.rel target = $region3
    $region8: #{tpu_custom_call.1} parent=1 // loop_exit
      _
    %597 = vsyncpa [#allocation3], 1
    %s598 = scalar_lea.sflag [#allocation3], 1
    %599 = vsyncpa %s598, 1
    %600 = vsyncpa [#allocation5], 1
    %s601 = scalar_lea.sflag [#allocation5], 1
    %602 = vsyncpa %s601, 1

</llo_original>
